<compile_context>
chip_gen: v7x
topology: tpu7x:2x2x1
jax: 0.10.0
libtpu: 0.0.40
codegen_flags: <defaults>
</compile_context>

<pallas_src>
import jax
import jax.numpy as jnp
from jax.experimental import pallas as pl
from jax.experimental.pallas import tpu as pltpu


def _round_up(n, m):
    return ((n + m - 1) // m) * m


def _classifier_kernel(x_ref, w1_ref, b1_ref, w2_ref, b2_ref, mask_ref, out_ref):
    # x_ref:    (1, TM, H)    bf16
    # w1_ref:   (H, H2p)      bf16
    # b1_ref:   (1, H2p)      f32
    # w2_ref:   (H2p, Tp)     bf16
    # b2_ref:   (1, Tp)       f32
    # mask_ref: (1, Tp, Sp)   bf16
    # out_ref:  (1, TM, Sp)   out_dtype
    x = x_ref[0]                      # (TM, H)
    w1 = w1_ref[...]                  # (H, H2p)
    b1 = b1_ref[...]                  # (1, H2p)
    w2 = w2_ref[...]                  # (H2p, Tp)
    b2 = b2_ref[...]                  # (1, Tp)
    mask = mask_ref[0]                # (Tp, Sp)

    # Linear(hidden -> hidden//2) + ReLU  (bf16 MXU inputs, f32 accumulate)
    h = jnp.dot(x, w1, preferred_element_type=jnp.float32) + b1
    h = jnp.maximum(h, 0.0)

    # SpatialDropout -> identity at inference time.

    # Linear(hidden//2 -> tag_size)
    f = jnp.dot(h.astype(w2.dtype), w2, preferred_element_type=jnp.float32) + b2

    # rel_weight = features_output @ rel_mask
    out = jnp.dot(f.astype(mask.dtype), mask, preferred_element_type=jnp.float32)
    out_ref[0] = out.astype(out_ref.dtype)


def multi_nonlinear_classifier(x, w1, b1, w2, b2, rel_mask, *, out_dtype=jnp.bfloat16):
    """x: [B, S, H], w1: [H, H2], b1: [H2], w2: [H2, T], b2: [T],
    rel_mask: [B, T, S] -> returns [B, S, S] in out_dtype."""
    B, S, H = x.shape
    H2 = w1.shape[1]
    T = w2.shape[1]
    assert rel_mask.shape == (B, T, S)

    LANE = 128
    Sp = _round_up(S, LANE)      # lane-dense output / mask last dim
    H2p = _round_up(H2, LANE)    # fill MXU contraction for second matmul
    Tp = _round_up(T, LANE)      # fill MXU contraction for final matmul

    cdt = jnp.bfloat16           # MXU operand dtype

    # Zero-padding is exact: padded x rows are sliced off, padded weight/bias/mask
    # rows & columns contribute zeros to every retained output element.
    xp = jnp.pad(x, ((0, 0), (0, Sp - S), (0, 0))).astype(cdt)
    w1p = jnp.pad(w1, ((0, 0), (0, H2p - H2))).astype(cdt)
    b1p = jnp.pad(b1, (0, H2p - H2)).astype(jnp.float32).reshape(1, H2p)
    w2p = jnp.pad(w2, ((0, H2p - H2), (0, Tp - T))).astype(cdt)
    b2p = jnp.pad(b2, (0, Tp - T)).astype(jnp.float32).reshape(1, Tp)
    maskp = jnp.pad(rel_mask, ((0, 0), (0, Tp - T), (0, Sp - S))).astype(cdt)

    # Row-tile size: biggest of {512, 256, 128} that divides Sp and keeps the
    # double-buffered x + output tiles comfortably inside scoped VMEM
    # (128 always divides Sp, so the fallback is safe on every generation).
    out_itemsize = jnp.dtype(out_dtype).itemsize
    TM = 128
    for cand in (512, 256):
        per_buf = cand * Sp * out_itemsize + cand * H * jnp.dtype(cdt).itemsize
        if Sp % cand == 0 and 2 * per_buf <= 8 * 1024 * 1024:
            TM = cand
            break

    grid = (B, Sp // TM)

    out_padded = pl.pallas_call(
        _classifier_kernel,
        out_shape=jax.ShapeDtypeStruct((B, Sp, Sp), out_dtype),
        grid_spec=pltpu.PrefetchScalarGridSpec(
            num_scalar_prefetch=0,
            grid=grid,
            in_specs=[
                pl.BlockSpec((1, TM, H), lambda b, i: (b, i, 0)),    # x row tile
                pl.BlockSpec((H, H2p), lambda b, i: (0, 0)),         # w1 (resident)
                pl.BlockSpec((1, H2p), lambda b, i: (0, 0)),         # b1 (resident)
                pl.BlockSpec((H2p, Tp), lambda b, i: (0, 0)),        # w2 (resident)
                pl.BlockSpec((1, Tp), lambda b, i: (0, 0)),          # b2 (resident)
                pl.BlockSpec((1, Tp, Sp), lambda b, i: (b, 0, 0)),   # rel_mask (per batch)
            ],
            out_specs=pl.BlockSpec((1, TM, Sp), lambda b, i: (b, i, 0)),
        ),
        compiler_params=pltpu.CompilerParams(
            dimension_semantics=("parallel", "parallel"),
        ),
    )(xp, w1p, b1p, w2p, b2p, maskp)

    return out_padded[:, :S, :S]


def reference(x, w1, b1, w2, b2, rel_mask):
    # Mirrors the kernel's numerics: bf16 matmul operands, f32 accumulation,
    # f32 bias-add / ReLU.
    bf = jnp.bfloat16
    h = jnp.einsum("bsh,hk->bsk", x.astype(bf), w1.astype(bf),
                   preferred_element_type=jnp.float32) + b1
    h = jnp.maximum(h, 0.0)
    f = jnp.einsum("bsk,kt->bst", h.astype(bf), w2.astype(bf),
                   preferred_element_type=jnp.float32) + b2
    out = jnp.einsum("bst,btu->bsu", f.astype(bf), rel_mask.astype(bf),
                     preferred_element_type=jnp.float32)
    return out


if __name__ == "__main__":
    # Small shapes consistent with the module: hidden=32 -> hidden//2=16, tag=16.
    B, S, H, T = 2, 8, 32, 16
    H2 = H // 2

    key = jax.random.PRNGKey(0)
    k_x, k_w1, k_b1, k_w2, k_b2, k_m = jax.random.split(key, 6)

    x = jax.random.normal(k_x, (B, S, H), dtype=jnp.float32)
    # Deterministic parameter init (synthetic; not a checkpoint load).
    w1 = jax.random.normal(k_w1, (H, H2), dtype=jnp.float32) * 0.1
    b1 = jax.random.normal(k_b1, (H2,), dtype=jnp.float32) * 0.1
    w2 = jax.random.normal(k_w2, (H2, T), dtype=jnp.float32) * 0.1
    b2 = jax.random.normal(k_b2, (T,), dtype=jnp.float32) * 0.1
    rel_mask = jax.random.normal(k_m, (B, T, S), dtype=jnp.float32)

    out = multi_nonlinear_classifier(x, w1, b1, w2, b2, rel_mask)
    out = jax.block_until_ready(out)

    ref = reference(x, w1, b1, w2, b2, rel_mask)
    assert out.shape == (B, S, S)
    assert jnp.allclose(out.astype(jnp.float32), ref, atol=5e-2, rtol=5e-2), \
        "mismatch vs reference"

    print("KERNEL_OK")
</pallas_src>

<mosaic_0001>
module attributes {stable_mosaic.version = 11 : i64} {
  func.func @_classifier_kernel(%arg0: i32, %arg1: i32, %arg2: memref<1x128x32xbf16, #tpu.memory_space<vmem>>, %arg3: memref<32x128xbf16, #tpu.memory_space<vmem>>, %arg4: memref<1x128xf32, #tpu.memory_space<vmem>>, %arg5: memref<128x128xbf16, #tpu.memory_space<vmem>>, %arg6: memref<1x128xf32, #tpu.memory_space<vmem>>, %arg7: memref<1x128x128xbf16, #tpu.memory_space<vmem>>, %arg8: memref<1x128x128xbf16, #tpu.memory_space<vmem>>) attributes {dimension_semantics = [#tpu.dimension_semantics<parallel>, #tpu.dimension_semantics<parallel>], iteration_bounds = array<i64: 2, 1>, scalar_prefetch = 0 : i64, scratch_operands = 0 : i64, tpu.core_type = #tpu.core_type<tc>, window_params = [{transform_indices = @transform_0, window_bounds = array<i64: 1, 128, 32>}, {pipeline_mode = #tpu.pipeline_mode<synchronous>, transform_indices = @transform_1, window_bounds = array<i64: 32, 128>}, {pipeline_mode = #tpu.pipeline_mode<synchronous>, transform_indices = @transform_2, window_bounds = array<i64: 1, 128>}, {pipeline_mode = #tpu.pipeline_mode<synchronous>, transform_indices = @transform_3, window_bounds = array<i64: 128, 128>}, {pipeline_mode = #tpu.pipeline_mode<synchronous>, transform_indices = @transform_4, window_bounds = array<i64: 1, 128>}, {transform_indices = @transform_5, window_bounds = array<i64: 1, 128, 128>}, {transform_indices = @transform_6, window_bounds = array<i64: 1, 128, 128>}]} {
    %c0 = arith.constant 0 : index
    %c0_0 = arith.constant 0 : index
    %c0_1 = arith.constant 0 : index
    %0 = vector.load %arg2[%c0, %c0_0, %c0_1] : memref<1x128x32xbf16, #tpu.memory_space<vmem>>, vector<1x128x32xbf16>
    %1 = vector.shape_cast %0 : vector<1x128x32xbf16> to vector<128x32xbf16>
    %c0_2 = arith.constant 0 : index
    %c0_3 = arith.constant 0 : index
    %2 = vector.load %arg3[%c0_2, %c0_3] : memref<32x128xbf16, #tpu.memory_space<vmem>>, vector<32x128xbf16>
    %c0_4 = arith.constant 0 : index
    %c0_5 = arith.constant 0 : index
    %3 = vector.load %arg4[%c0_4, %c0_5] : memref<1x128xf32, #tpu.memory_space<vmem>>, vector<1x128xf32>
    %c0_6 = arith.constant 0 : index
    %c0_7 = arith.constant 0 : index
    %4 = vector.load %arg5[%c0_6, %c0_7] : memref<128x128xbf16, #tpu.memory_space<vmem>>, vector<128x128xbf16>
    %c0_8 = arith.constant 0 : index
    %c0_9 = arith.constant 0 : index
    %5 = vector.load %arg6[%c0_8, %c0_9] : memref<1x128xf32, #tpu.memory_space<vmem>>, vector<1x128xf32>
    %c0_10 = arith.constant 0 : index
    %c0_11 = arith.constant 0 : index
    %c0_12 = arith.constant 0 : index
    %6 = vector.load %arg7[%c0_10, %c0_11, %c0_12] : memref<1x128x128xbf16, #tpu.memory_space<vmem>>, vector<1x128x128xbf16>
    %7 = vector.shape_cast %6 : vector<1x128x128xbf16> to vector<128x128xbf16>
    %cst = arith.constant dense<0.000000e+00> : vector<128x128xf32>
    %8 = tpu.matmul %1, %2, %cst {dimension_numbers = #tpu.dot_dimension_numbers<[1], [0], [0], [1], [0, 0, 1, 1], [], []>} : vector<128x32xbf16>, vector<32x128xbf16>, vector<128x128xf32> -> vector<128x128xf32>
    %9 = vector.broadcast %3 : vector<1x128xf32> to vector<128x128xf32>
    %10 = arith.addf %8, %9 : vector<128x128xf32>
    %cst_13 = arith.constant 0.000000e+00 : f32
    %11 = vector.broadcast %cst_13 : f32 to vector<128x128xf32>
    %12 = arith.maximumf %10, %11 : vector<128x128xf32>
    %13 = arith.truncf %12 : vector<128x128xf32> to vector<128x128xbf16>
    %cst_14 = arith.constant dense<0.000000e+00> : vector<128x128xf32>
    %14 = tpu.matmul %13, %4, %cst_14 {dimension_numbers = #tpu.dot_dimension_numbers<[1], [0], [0], [1], [0, 0, 1, 1], [], []>} : vector<128x128xbf16>, vector<128x128xbf16>, vector<128x128xf32> -> vector<128x128xf32>
    %15 = vector.broadcast %5 : vector<1x128xf32> to vector<128x128xf32>
    %16 = arith.addf %14, %15 : vector<128x128xf32>
    %17 = arith.truncf %16 : vector<128x128xf32> to vector<128x128xbf16>
    %cst_15 = arith.constant dense<0.000000e+00> : vector<128x128xf32>
    %18 = tpu.matmul %17, %7, %cst_15 {dimension_numbers = #tpu.dot_dimension_numbers<[1], [0], [0], [1], [0, 0, 1, 1], [], []>} : vector<128x128xbf16>, vector<128x128xbf16>, vector<128x128xf32> -> vector<128x128xf32>
    %19 = arith.truncf %18 : vector<128x128xf32> to vector<128x128xbf16>
    %c0_16 = arith.constant 0 : index
    %c0_17 = arith.constant 0 : index
    %c0_18 = arith.constant 0 : index
    %20 = vector.load %arg8[%c0_16, %c0_17, %c0_18] : memref<1x128x128xbf16, #tpu.memory_space<vmem>>, vector<1x128x128xbf16>
    %21 = vector.shape_cast %20 : vector<1x128x128xbf16> to vector<128x128xbf16>
    %22 = vector.shape_cast %19 : vector<128x128xbf16> to vector<1x128x128xbf16>
    tpu.vector_store %arg8[%c0_16, %c0_17, %c0_18], %22 {strides = array<i32>} : memref<1x128x128xbf16, #tpu.memory_space<vmem>>, vector<1x128x128xbf16>,
    return
  }
  func.func @transform_0(%arg0: i32, %arg1: i32) -> (i32, i32, i32) {
    %c0_i32 = arith.constant 0 : i32
    %c0_i32_0 = arith.constant 0 : i32
    return %arg0, %arg1, %c0_i32 : i32, i32, i32
  }
  func.func @transform_1(%arg0: i32, %arg1: i32) -> (i32, i32) {
    %c0_i32 = arith.constant 0 : i32
    %c0_i32_0 = arith.constant 0 : i32
    %c0_i32_1 = arith.constant 0 : i32
    return %c0_i32, %c0_i32_0 : i32, i32
  }
  func.func @transform_2(%arg0: i32, %arg1: i32) -> (i32, i32) {
    %c0_i32 = arith.constant 0 : i32
    %c0_i32_0 = arith.constant 0 : i32
    %c0_i32_1 = arith.constant 0 : i32
    return %c0_i32, %c0_i32_0 : i32, i32
  }
  func.func @transform_3(%arg0: i32, %arg1: i32) -> (i32, i32) {
    %c0_i32 = arith.constant 0 : i32
    %c0_i32_0 = arith.constant 0 : i32
    %c0_i32_1 = arith.constant 0 : i32
    return %c0_i32, %c0_i32_0 : i32, i32
  }
  func.func @transform_4(%arg0: i32, %arg1: i32) -> (i32, i32) {
    %c0_i32 = arith.constant 0 : i32
    %c0_i32_0 = arith.constant 0 : i32
    %c0_i32_1 = arith.constant 0 : i32
    return %c0_i32, %c0_i32_0 : i32, i32
  }
  func.func @transform_5(%arg0: i32, %arg1: i32) -> (i32, i32, i32) {
    %c0_i32 = arith.constant 0 : i32
    %c0_i32_0 = arith.constant 0 : i32
    %c0_i32_1 = arith.constant 0 : i32
    return %arg0, %c0_i32, %c0_i32_0 : i32, i32, i32
  }
  func.func @transform_6(%arg0: i32, %arg1: i32) -> (i32, i32, i32) {
    %c0_i32 = arith.constant 0 : i32
    %c0_i32_0 = arith.constant 0 : i32
    return %arg0, %arg1, %c0_i32 : i32, i32, i32
  }
}

</mosaic_0001>

<llo_original>
// kernel: tpu_custom_call.1
$region0: #{tpu_custom_call.1}
  #allocation0 [shape = 'u32[]', space=smem, size = 0x4, offset = 0x4, fixed_abs, tag = 'smem constant byte address 0x4 - core index']
  #allocation1 [shape = 'u32[144,128]{1,0:T(1,128)}', space=vmem, size = 0x12000, scoped, tag = 'internal scratch']
  %s0 = inlined_call_operand.vmem [shape: bf16[2,128,32], index: 0, kind: input, shape index: {}]
  %s1 = inlined_call_operand.vmem [shape: bf16[32,128], index: 1, kind: input, shape index: {}]
  %s2 = inlined_call_operand.vmem [shape: f32[1,128], index: 2, kind: input, shape index: {}]
  %s3 = inlined_call_operand.hbm [shape: bf16[128,128], index: 3, kind: input, shape index: {}]
  %s4 = inlined_call_operand.vmem [shape: f32[1,128], index: 4, kind: input, shape index: {}]
  %s5 = inlined_call_operand.vmem [shape: bf16[2,128,128], index: 5, kind: input, shape index: {}]
  %s6 = inlined_call_operand.hbm [shape: bf16[2,128,128], index: 6, kind: output, shape index: {}]
  %s7 = sld [smem:[#allocation0]]
  $region61: #{tpu_custom_call.1} parent=0
    _
  %s9 = ssub.s32 1, %s7
  %s10 = scalar_select 0, %s9, %s7
  $region1: #{tpu_custom_call.1} parent=0
    #allocation2 [shape = 'u8[32768]{0}', space=vmem, size = 0x8000, scoped, tag = 'input window, operand 3, single buffered']
    #allocation3 [shape = 's32[2]{0}', space=sflag, size = 0x8, scoped, tag = 'scoped memory for tpu_custom_call.1']
    #allocation4 [shape = 's32[2]{0}', space=sflag, size = 0x8, scoped, tag = 'scoped memory for tpu_custom_call.1']
    #allocation5 [shape = 'u8[65536]{0}', space=vmem, size = 0x10000, scoped, tag = 'output window, operand 0']
    %11 = vsyncpa [#allocation3], 0
    %12 = vsyncpa [#allocation4], 0
    %s13 = scalar_lea.sflag [#allocation4], 1
    %14 = vsyncpa %s13, 0
    loop: start=0, step=1, limit=4
    $region2: #{tpu_custom_call.1} parent=1 // loop_pre_header
      _
    $region3: #{tpu_custom_call.1} parent=1 // loop_header
      %s16 = sphi 0, %s20
      %p17 = scmp.ge.s32.totalorder %s16, 4
      %s23 = sphi 0, %s35
      %s24 = sphi 0, %s31
      %s25 = sphi 0, %s23
      %s26 = sphi 0, %s24
      %s27 = sphi 0, %s25
      %s28 = sphi 0, %s26
      %s40 = sphi 0, %s42
      %s43 = sphi 0, %s40
      %s44 = sphi 0, %s43
      %s60 = sphi 0, %s44
      %s64 = sphi 0, %s64
      %s66 = sphi 0, %s64
      %s67 = sphi 0, %s66
      %s81 = sphi 0, %s67
      %s85 = sphi 0, %s85
      %s87 = sphi 0, %s85
      %s88 = sphi 0, %s87
      %s102 = sphi 0, %s88
      %s106 = sphi 0, %s106
      %s108 = sphi 0, %s106
      %s109 = sphi 0, %s108
      %s123 = sphi 0, %s109
      %s127 = sphi 0, %s127
      %s129 = sphi 0, %s127
      %s130 = sphi 0, %s129
      %s144 = sphi 0, %s130
      %s150 = sphi 0, %s152
      %s153 = sphi 0, %s150
      %s154 = sphi 0, %s153
      %s170 = sphi 0, %s154
      %s178 = sphi 0, %s180
      %s181 = sphi 0, %s178
      %s182 = sphi 0, %s181
      %s198 = sphi 0, %s182
    $region4: #{tpu_custom_call.1} parent=1 // loop_header_branch
      %19 = sbr.rel (%p17) target = $region8
    $region5: #{tpu_custom_call.1} parent=1 // loop_body
      %s21 = ssub.s32 %s16, 1
      %s22 = ssub.s32 %s16, 2
      %s29 = sadd.s32 1, %s24
      %p30 = scmp.ge.s32.totalorder %s29, 1
      %s31 = scalar_select %p30, 0, %s29
      %s32 = sadd.s32 1, %s23
      %s33 = scalar_select %p30, %s32, %s23
      %p34 = scmp.ge.s32.totalorder %s33, 2
      %s35 = scalar_select %p34, 0, %s33
      %s36 = ssub.s32 %s23, %s35
      %s37 = ssub.s32 %s24, %s31
      %s38 = sor.u32 %s36, %s37
      %p39 = scmp.eq.s32.totalorder %s38, 0
      %s41 = sadd.s32 %s40, 1
      %s42 = scalar_select %p39, %s40, %s41
      %p45 = pneg %p39
      %p46 = scmp.eq.s32.totalorder %s16, 1
      %p47 = por %p45, %p46
      %p48 = scmp.ne.s32.totalorder %s40, %s43
      %p49 = scmp.eq.s32.totalorder %s16, 0
      %p50 = por %p48, %p49
      %p51 = scmp.ne.s32.totalorder %s40, %s43
      %p52 = scmp.eq.s32.totalorder %s21, 1
      %p53 = por %p51, %p52
      %p54 = scmp.ne.s32.totalorder %s43, %s44
      %p55 = scmp.eq.s32.totalorder %s21, 0
      %p56 = por %p54, %p55
      %p57 = scmp.ne.s32.totalorder %s43, %s44
      %p58 = scmp.eq.s32.totalorder %s22, 1
      %p59 = por %p57, %p58
      %p61 = scmp.ne.s32.totalorder %s44, %s60
      %p62 = scmp.eq.s32.totalorder %s22, 0
      %p63 = por %p61, %p62
      %s65 = sadd.s32 %s64, 1
      %p68 = scmp.eq.s32.totalorder %s16, 1
      %p69 = scmp.ne.s32.totalorder %s64, %s66
      %p70 = scmp.eq.s32.totalorder %s16, 0
      %p71 = por %p69, %p70
      %p72 = scmp.ne.s32.totalorder %s64, %s66
      %p73 = scmp.eq.s32.totalorder %s21, 1
      %p74 = por %p72, %p73
      %p75 = scmp.ne.s32.totalorder %s66, %s67
      %p76 = scmp.eq.s32.totalorder %s21, 0
      %p77 = por %p75, %p76
      %p78 = scmp.ne.s32.totalorder %s66, %s67
      %p79 = scmp.eq.s32.totalorder %s22, 1
      %p80 = por %p78, %p79
      %p82 = scmp.ne.s32.totalorder %s67, %s81
      %p83 = scmp.eq.s32.totalorder %s22, 0
      %p84 = por %p82, %p83
      %s86 = sadd.s32 %s85, 1
      %p89 = scmp.eq.s32.totalorder %s16, 1
      %p90 = scmp.ne.s32.totalorder %s85, %s87
      %p91 = scmp.eq.s32.totalorder %s16, 0
      %p92 = por %p90, %p91
      %p93 = scmp.ne.s32.totalorder %s85, %s87
      %p94 = scmp.eq.s32.totalorder %s21, 1
      %p95 = por %p93, %p94
      %p96 = scmp.ne.s32.totalorder %s87, %s88
      %p97 = scmp.eq.s32.totalorder %s21, 0
      %p98 = por %p96, %p97
      %p99 = scmp.ne.s32.totalorder %s87, %s88
      %p100 = scmp.eq.s32.totalorder %s22, 1
      %p101 = por %p99, %p100
      %p103 = scmp.ne.s32.totalorder %s88, %s102
      %p104 = scmp.eq.s32.totalorder %s22, 0
      %p105 = por %p103, %p104
      %s107 = sadd.s32 %s106, 1
      %p110 = scmp.eq.s32.totalorder %s16, 1
      %p111 = scmp.ne.s32.totalorder %s106, %s108
      %p112 = scmp.eq.s32.totalorder %s16, 0
      %p113 = por %p111, %p112
      %p114 = scmp.ne.s32.totalorder %s106, %s108
      %p115 = scmp.eq.s32.totalorder %s21, 1
      %p116 = por %p114, %p115
      %p117 = scmp.ne.s32.totalorder %s108, %s109
      %p118 = scmp.eq.s32.totalorder %s21, 0
      %p119 = por %p117, %p118
      %p120 = scmp.ne.s32.totalorder %s108, %s109
      %p121 = scmp.eq.s32.totalorder %s22, 1
      %p122 = por %p120, %p121
      %p124 = scmp.ne.s32.totalorder %s109, %s123
      %p125 = scmp.eq.s32.totalorder %s22, 0
      %p126 = por %p124, %p125
      %s128 = sadd.s32 %s127, 1
      %p131 = scmp.eq.s32.totalorder %s16, 1
      %p132 = scmp.ne.s32.totalorder %s127, %s129
      %p133 = scmp.eq.s32.totalorder %s16, 0
      %p134 = por %p132, %p133
      %p135 = scmp.ne.s32.totalorder %s127, %s129
      %p136 = scmp.eq.s32.totalorder %s21, 1
      %p137 = por %p135, %p136
      %p138 = scmp.ne.s32.totalorder %s129, %s130
      %p139 = scmp.eq.s32.totalorder %s21, 0
      %p140 = por %p138, %p139
      %p141 = scmp.ne.s32.totalorder %s129, %s130
      %p142 = scmp.eq.s32.totalorder %s22, 1
      %p143 = por %p141, %p142
      %p145 = scmp.ne.s32.totalorder %s130, %s144
      %p146 = scmp.eq.s32.totalorder %s22, 0
      %p147 = por %p145, %p146
      %s148 = ssub.s32 %s23, %s35
      %p149 = scmp.eq.s32.totalorder %s148, 0
      %s151 = sadd.s32 %s150, 1
      %s152 = scalar_select %p149, %s150, %s151
      %p155 = pneg %p149
      %p156 = scmp.eq.s32.totalorder %s16, 1
      %p157 = por %p155, %p156
      %p158 = scmp.ne.s32.totalorder %s150, %s153
      %p159 = scmp.eq.s32.totalorder %s16, 0
      %p160 = por %p158, %p159
      %p161 = scmp.ne.s32.totalorder %s150, %s153
      %p162 = scmp.eq.s32.totalorder %s21, 1
      %p163 = por %p161, %p162
      %p164 = scmp.ne.s32.totalorder %s153, %s154
      %p165 = scmp.eq.s32.totalorder %s21, 0
      %p166 = por %p164, %p165
      %p167 = scmp.ne.s32.totalorder %s153, %s154
      %p168 = scmp.eq.s32.totalorder %s22, 1
      %p169 = por %p167, %p168
      %p171 = scmp.ne.s32.totalorder %s154, %s170
      %p172 = scmp.eq.s32.totalorder %s22, 0
      %p173 = por %p171, %p172
      %s174 = ssub.s32 %s23, %s35
      %s175 = ssub.s32 %s24, %s31
      %s176 = sor.u32 %s174, %s175
      %p177 = scmp.eq.s32.totalorder %s176, 0
      %s179 = sadd.s32 %s178, 1
      %s180 = scalar_select %p177, %s178, %s179
      %p183 = pneg %p177
      %p184 = scmp.eq.s32.totalorder %s16, 1
      %p185 = por %p183, %p184
      %p186 = scmp.ne.s32.totalorder %s178, %s181
      %p187 = scmp.eq.s32.totalorder %s16, 0
      %p188 = por %p186, %p187
      %p189 = scmp.ne.s32.totalorder %s178, %s181
      %p190 = scmp.eq.s32.totalorder %s21, 1
      %p191 = por %p189, %p190
      %p192 = scmp.ne.s32.totalorder %s181, %s182
      %p193 = scmp.eq.s32.totalorder %s21, 0
      %p194 = por %p192, %p193
      %p195 = scmp.ne.s32.totalorder %s181, %s182
      %p196 = scmp.eq.s32.totalorder %s22, 1
      %p197 = por %p195, %p196
      %p199 = scmp.ne.s32.totalorder %s182, %s198
      %p200 = scmp.eq.s32.totalorder %s22, 0
      %p201 = por %p199, %p200
      %p202 = scmp.le.s32.totalorder 1, %s16
      %p203 = scmp.lt.s32.totalorder %s16, 3
      %p204 = pnand %p202, %p203
      %p205 = pneg %p204
      // Predicated region
      $region9: #{tpu_custom_call.1} parent=5 // pred_check
        _
      $region10: #{tpu_custom_call.1} parent=5 // pred_check_branch
        %207 = sbr.rel (%p204) target = $region12
      $region11: #{tpu_custom_call.1} parent=5 // pred_region
        %s208 = ssub.s32 %s16, 1
        // Predicated region
        $region13: #{tpu_custom_call.1} parent=11 // pred_check
          %p209 = pneg %p77
        $region14: #{tpu_custom_call.1} parent=11 // pred_check_branch
          %211 = sbr.rel (%p209) target = $region16
        $region15: #{tpu_custom_call.1} parent=11 // pred_region
          _
        $region16: #{tpu_custom_call.1} parent=11 // pred_fallthru
          _
        // Predicated region
        $region17: #{tpu_custom_call.1} parent=11 // pred_check
          %p212 = pneg %p98
        $region18: #{tpu_custom_call.1} parent=11 // pred_check_branch
          %214 = sbr.rel (%p212) target = $region20
        $region19: #{tpu_custom_call.1} parent=11 // pred_region
          _
        $region20: #{tpu_custom_call.1} parent=11 // pred_fallthru
          _
        // Predicated region
        $region21: #{tpu_custom_call.1} parent=11 // pred_check
          %p215 = pneg %p119
        $region22: #{tpu_custom_call.1} parent=11 // pred_check_branch
          %217 = sbr.rel (%p215) target = $region24
        $region23: #{tpu_custom_call.1} parent=11 // pred_region
          %s219 = ssub.s32 1024, 1024
          %220 = vsyncadd [#allocation3], %s219
          %s221 = sshll.u32 [#allocation2], 4
          %s222 = int_to_ptr.vmem [resolvable:$true] %s221
          %227 = dma.hbm_to_vmem [thread:$0]  %s3, 1024, %s222, [#allocation3], 64, 64, 4
        $region24: #{tpu_custom_call.1} parent=11 // pred_fallthru
          _
        // Predicated region
        $region25: #{tpu_custom_call.1} parent=11 // pred_check
          %p228 = pneg %p140
        $region26: #{tpu_custom_call.1} parent=11 // pred_check_branch
          %230 = sbr.rel (%p228) target = $region28
        $region27: #{tpu_custom_call.1} parent=11 // pred_region
          _
        $region28: #{tpu_custom_call.1} parent=11 // pred_fallthru
          _
      $region12: #{tpu_custom_call.1} parent=5 // pred_fallthru
        _
      %p231 = scmp.lt.s32.totalorder %s16, 2
      // Predicated region
      $region29: #{tpu_custom_call.1} parent=5 // pred_check
        %p232 = pneg %p231
      $region30: #{tpu_custom_call.1} parent=5 // pred_check_branch
        %234 = sbr.rel (%p232) target = $region32
      $region31: #{tpu_custom_call.1} parent=5 // pred_region
        // Predicated region
        $region33: #{tpu_custom_call.1} parent=31 // pred_check
          %p235 = pneg %p50
        $region34: #{tpu_custom_call.1} parent=31 // pred_check_branch
          %237 = sbr.rel (%p235) target = $region36
        $region35: #{tpu_custom_call.1} parent=31 // pred_region
          %s238 = smul.u32 16, %s24
          %p239 = scmp.lt.s32.totalorder %s23, 1
          %s240 = scalar_select %p239, %s23, 1
          %p241 = scmp.lt.s32.totalorder %s238, 15
          %s242 = scalar_select %p241, %s238, 15
          %s243 = smul.addr %s240, 16
          %s244 = sadd.s32 %s242, %s243
          %s245 = smul.addr %s244, 4
          %s246 = scalar_lea.vmem %s0, %s245
          %s247 = smul.u32 16, %s24
        $region36: #{tpu_custom_call.1} parent=31 // pred_fallthru
          _
        // Predicated region
        $region37: #{tpu_custom_call.1} parent=31 // pred_check
          %p248 = pneg %p160
        $region38: #{tpu_custom_call.1} parent=31 // pred_check_branch
          %250 = sbr.rel (%p248) target = $region40
        $region39: #{tpu_custom_call.1} parent=31 // pred_region
          %p251 = scmp.lt.s32.totalorder %s23, 1
          %s252 = scalar_select %p251, %s23, 1
          %s253 = smul.addr %s252, 16
          %s254 = smul.addr %s253, 4
          %s255 = scalar_lea.vmem %s5, %s254
        $region40: #{tpu_custom_call.1} parent=31 // pred_fallthru
          _
      $region32: #{tpu_custom_call.1} parent=5 // pred_fallthru
        _
      %p256 = scmp.le.s32.totalorder 1, %s16
      %p257 = scmp.lt.s32.totalorder %s16, 3
      %p258 = pnand %p256, %p257
      %p259 = pneg %p258
      // Predicated region
      $region41: #{tpu_custom_call.1} parent=5 // pred_check
        _
      $region42: #{tpu_custom_call.1} parent=5 // pred_check_branch
        %261 = sbr.rel (%p258) target = $region44
      $region43: #{tpu_custom_call.1} parent=5 // pred_region
        %s262 = ssub.s32 %s16, 1
        // Predicated region
        $region45: #{tpu_custom_call.1} parent=43 // pred_check
          %p263 = pneg %p119
        $region46: #{tpu_custom_call.1} parent=43 // pred_check_branch
          %265 = sbr.rel (%p263) target = $region48
        $region47: #{tpu_custom_call.1} parent=43 // pred_region
          %266 = dma.done [#allocation3], 1024
        $region48: #{tpu_custom_call.1} parent=43 // pred_fallthru
          _
        %s267 = smul.u32 16, %s26
        %p268 = scmp.lt.s32.totalorder %s25, 1
        %s269 = scalar_select %p268, %s25, 1
        %p270 = scmp.lt.s32.totalorder %s267, 15
        %s271 = scalar_select %p270, %s267, 15
        %s272 = smul.addr %s269, 16
        %s273 = sadd.s32 %s271, %s272
        %s274 = smul.addr %s273, 4
        %s275 = scalar_lea.vmem %s0, %s274
        %p276 = pneg %p56
        %p277 = pneg %p53
        %p278 = pneg %p77
        %p279 = pneg %p74
        %p280 = pneg %p98
        %p281 = pneg %p95
        %p282 = pneg %p119
        %p283 = pneg %p116
        %p284 = pneg %p140
        %p285 = pneg %p137
        %p286 = scmp.lt.s32.totalorder %s25, 1
        %s287 = scalar_select %p286, %s25, 1
        %s288 = smul.addr %s287, 16
        %s289 = smul.addr %s288, 4
        %s290 = scalar_lea.vmem %s5, %s289
        %p291 = pneg %p166
        %p292 = pneg %p163
        %p293 = pneg %p194
        %p294 = pneg %p191
        %s295 = sand.u32 %s181, 1
        %s296 = scalar_lea.sflag [#allocation4], %s295
        %s297 = sand.u32 %s181, 1
        %s298 = smul.addr %s297, 64
        %s299 = scalar_lea.vmem [#allocation5], %s298
        %s300 = smul.u32 16, %s26
        %p301 = scmp.lt.s32.totalorder %s25, 1
        %s302 = scalar_select %p301, %s25, 1
        %p303 = scmp.lt.s32.totalorder %s300, 15
        %s304 = scalar_select %p303, %s300, 15
        %s305 = smul.addr %s302, 16
        %s306 = sadd.s32 %s304, %s305
        %s307 = smul.addr %s306, 4
        %s308 = scalar_lea.vmem %s0, %s307
        %s309 = smul.u32 16, %s26
        %p310 = scmp.lt.s32.totalorder %s25, 1
        %s311 = scalar_select %p310, %s25, 1
        %s312 = smul.addr %s311, 16
        %s313 = smul.addr %s312, 4
        %s314 = scalar_lea.vmem %s5, %s313
        %s315 = smul.u32 16, %s26
        %v317 = vld [vmem:[%s308] sm:$0xf]
        %v318 = vld [vmem:[%s308 + $0x4] sm:$0xf]
        %v319 = vld [vmem:[%s308 + $0x8] sm:$0xf]
        %v320 = vld [vmem:[%s308 + $0xc] sm:$0xf]
        %v321 = vld [vmem:[%s308 + $0x10] sm:$0xf]
        %v322 = vld [vmem:[%s308 + $0x14] sm:$0xf]
        %v323 = vld [vmem:[%s308 + $0x18] sm:$0xf]
        %v324 = vld [vmem:[%s308 + $0x1c] sm:$0xf]
        %v325 = vld [vmem:[%s308 + $0x20] sm:$0xf]
        %v326 = vld [vmem:[%s308 + $0x24] sm:$0xf]
        %v327 = vld [vmem:[%s308 + $0x28] sm:$0xf]
        %v328 = vld [vmem:[%s308 + $0x2c] sm:$0xf]
        %v329 = vld [vmem:[%s308 + $0x30] sm:$0xf]
        %v330 = vld [vmem:[%s308 + $0x34] sm:$0xf]
        %v331 = vld [vmem:[%s308 + $0x38] sm:$0xf]
        %v332 = vld [vmem:[%s308 + $0x3c] sm:$0xf]
        %v333 = vld [vmem:[%s1] sm:$0xf]
        %v334 = vld [vmem:[%s1 + $0x4] sm:$0xf]
        %v335 = vld [vmem:[%s1 + $0x8] sm:$0xf]
        %v336 = vld [vmem:[%s1 + $0xc] sm:$0xf]
        %v337 = vld [vmem:[%s2] sm:$0x1]
        %v338 = vld [vmem:[#allocation2] sm:$0xf]
        %v339 = vld [vmem:[#allocation2 + $0x4] sm:$0xf]
        %v340 = vld [vmem:[#allocation2 + $0x8] sm:$0xf]
        %v341 = vld [vmem:[#allocation2 + $0xc] sm:$0xf]
        %v342 = vld [vmem:[#allocation2 + $0x10] sm:$0xf]
        %v343 = vld [vmem:[#allocation2 + $0x14] sm:$0xf]
        %v344 = vld [vmem:[#allocation2 + $0x18] sm:$0xf]
        %v345 = vld [vmem:[#allocation2 + $0x1c] sm:$0xf]
        %v346 = vld [vmem:[#allocation2 + $0x20] sm:$0xf]
        %v347 = vld [vmem:[#allocation2 + $0x24] sm:$0xf]
        %v348 = vld [vmem:[#allocation2 + $0x28] sm:$0xf]
        %v349 = vld [vmem:[#allocation2 + $0x2c] sm:$0xf]
        %v350 = vld [vmem:[#allocation2 + $0x30] sm:$0xf]
        %v351 = vld [vmem:[#allocation2 + $0x34] sm:$0xf]
        %v352 = vld [vmem:[#allocation2 + $0x38] sm:$0xf]
        %v353 = vld [vmem:[#allocation2 + $0x3c] sm:$0xf]
        %v354 = vld [vmem:[%s4] sm:$0x1]
        %v355 = vld [vmem:[%s314] sm:$0xf]
        %v356 = vld [vmem:[%s314 + $0x4] sm:$0xf]
        %v357 = vld [vmem:[%s314 + $0x8] sm:$0xf]
        %v358 = vld [vmem:[%s314 + $0xc] sm:$0xf]
        %v359 = vld [vmem:[%s314 + $0x10] sm:$0xf]
        %v360 = vld [vmem:[%s314 + $0x14] sm:$0xf]
        %v361 = vld [vmem:[%s314 + $0x18] sm:$0xf]
        %v362 = vld [vmem:[%s314 + $0x1c] sm:$0xf]
        %v363 = vld [vmem:[%s314 + $0x20] sm:$0xf]
        %v364 = vld [vmem:[%s314 + $0x24] sm:$0xf]
        %v365 = vld [vmem:[%s314 + $0x28] sm:$0xf]
        %v366 = vld [vmem:[%s314 + $0x2c] sm:$0xf]
        %v367 = vld [vmem:[%s314 + $0x30] sm:$0xf]
        %v368 = vld [vmem:[%s314 + $0x34] sm:$0xf]
        %v369 = vld [vmem:[%s314 + $0x38] sm:$0xf]
        %v370 = vld [vmem:[%s314 + $0x3c] sm:$0xf]
        %v372 = vlaneseq
        %v373 = vshrl.u32 %v372, 7
        %v374 = vsub.s32 0, %v373
        %v375 = vrot.slane %v337, %v374
        %v393 = vunpack.c.l.b16 %v317
        %v394 = vunpack.c.l.b16 %v318
        %v395 = vunpack.c.l.b16 %v319
        %v396 = vunpack.c.l.b16 %v320
        %v397 = vunpack.c.l.b16 %v321
        %v398 = vunpack.c.l.b16 %v322
        %v399 = vunpack.c.l.b16 %v323
        %v400 = vunpack.c.l.b16 %v324
        %v401 = vunpack.c.l.b16 %v325
        %v402 = vunpack.c.l.b16 %v326
        %v403 = vunpack.c.l.b16 %v327
        %v404 = vunpack.c.l.b16 %v328
        %v405 = vunpack.c.l.b16 %v329
        %v406 = vunpack.c.l.b16 %v330
        %v407 = vunpack.c.l.b16 %v331
        %v408 = vunpack.c.l.b16 %v332
        %v409 = vpack.c.b16 %v394, %v393
        %v410 = vpack.c.b16 %v396, %v395
        %v411 = vpack.c.b16 %v398, %v397
        %v412 = vpack.c.b16 %v400, %v399
        %v413 = vpack.c.b16 %v402, %v401
        %v414 = vpack.c.b16 %v404, %v403
        %v415 = vpack.c.b16 %v406, %v405
        %v416 = vpack.c.b16 %v408, %v407
        %v421 = vunpack.c.l.b16 %v333
        %v422 = vunpack.c.l.b16 %v334
        %v423 = vunpack.c.l.b16 %v335
        %v424 = vunpack.c.l.b16 %v336
        %v425 = vpack.c.b16 %v422, %v421
        %v426 = vpack.c.b16 %v424, %v423
        %vm429 = vcmask 261120
        %v431 = vsel %vm429, %v409, 0
        %v434 = vsel %vm429, %v410, 0
        %v437 = vsel %vm429, %v411, 0
        %v440 = vsel %vm429, %v412, 0
        %v443 = vsel %vm429, %v413, 0
        %v446 = vsel %vm429, %v414, 0
        %v449 = vsel %vm429, %v415, 0
        %v452 = vsel %vm429, %v416, 0
        %454 = vmatprep.subr.bf16.mxu0 0
        %455 = vmatpush1.bf16.msra.mxu0 %v425
        %456 = vmatprep.subr.bf16.mxu0 0
        %457 = vmatpush1.bf16.msra.mxu0 %v426
        %458 = vmatprep.subr.bf16.mxu0 0
        %459 = vmatpush1.bf16.msra.mxu0 0
        %460 = vmatprep.subr.bf16.mxu0 0
        %461 = vmatpush1.bf16.msra.mxu0 0
        %462 = vmatprep.subr.bf16.mxu0 0
        %463 = vmatpush1.bf16.msra.mxu0 0
        %464 = vmatprep.subr.bf16.mxu0 0
        %465 = vmatpush1.bf16.msra.mxu0 0
        %466 = vmatprep.subr.bf16.mxu0 0
        %467 = vmatpush1.bf16.msra.mxu0 0
        %468 = vmatprep.subr.bf16.mxu0 0
        %469 = vmatpush1.bf16.msra.mxu0 0
        %470 = vmatprep.subr.bf16.mxu0 0
        %471 = vmatpush1.bf16.msra.mxu0 0
        %472 = vmatprep.subr.bf16.mxu0 0
        %473 = vmatpush1.bf16.msra.mxu0 0
        %474 = vmatprep.subr.bf16.mxu0 0
        %475 = vmatpush1.bf16.msra.mxu0 0
        %476 = vmatprep.subr.bf16.mxu0 0
        %477 = vmatpush1.bf16.msra.mxu0 0
        %478 = vmatprep.subr.bf16.mxu0 0
        %479 = vmatpush1.bf16.msra.mxu0 0
        %480 = vmatprep.subr.bf16.mxu0 0
        %481 = vmatpush1.bf16.msra.mxu0 0
        %482 = vmatprep.subr.bf16.mxu0 0
        %483 = vmatpush1.bf16.msra.mxu0 0
        %484 = vmatprep.subr.bf16.mxu0 0
        %485 = vmatpush1.bf16.msra.mxu0 0
        %486 = vmatprep.mubr.bf16.mxu0 0
        %487 = vmatmul.mubr.bf16.gmra.mrb[0].mxu0 %v431
        %v488 = vpop.f32.mrb[0].mxu0
        %v489 = vadd.f32 %v375, %v488
        %v490 = vpop.f32.mrb[0].mxu0
        %v491 = vpop.f32.mrb[0].mxu0
        %v492 = vadd.f32 %v375, %v491
        %v493 = vpop.f32.mrb[0].mxu0
        %494 = vmatprep.mubr.bf16.mxu0 0
        %495 = vmatmul.mubr.bf16.gmra.mrb[0].mxu0 %v434
        %v496 = vpop.f32.mrb[0].mxu0
        %v497 = vadd.f32 %v375, %v496
        %v498 = vpop.f32.mrb[0].mxu0
        %v499 = vpop.f32.mrb[0].mxu0
        %v500 = vadd.f32 %v375, %v499
        %v501 = vpop.f32.mrb[0].mxu0
        %502 = vmatprep.mubr.bf16.mxu0 0
        %503 = vmatmul.mubr.bf16.gmra.mrb[0].mxu0 %v437
        %v504 = vpop.f32.mrb[0].mxu0
        %v505 = vadd.f32 %v375, %v504
        %v506 = vpop.f32.mrb[0].mxu0
        %v507 = vpop.f32.mrb[0].mxu0
        %v508 = vadd.f32 %v375, %v507
        %v509 = vpop.f32.mrb[0].mxu0
        %510 = vmatprep.mubr.bf16.mxu0 0
        %511 = vmatmul.mubr.bf16.gmra.mrb[0].mxu0 %v440
        %v512 = vpop.f32.mrb[0].mxu0
        %v513 = vadd.f32 %v375, %v512
        %v514 = vpop.f32.mrb[0].mxu0
        %v515 = vpop.f32.mrb[0].mxu0
        %v516 = vadd.f32 %v375, %v515
        %v517 = vpop.f32.mrb[0].mxu0
        %518 = vmatprep.mubr.bf16.mxu0 0
        %519 = vmatmul.mubr.bf16.gmra.mrb[0].mxu0 %v443
        %v520 = vpop.f32.mrb[0].mxu0
        %v521 = vadd.f32 %v375, %v520
        %v522 = vpop.f32.mrb[0].mxu0
        %v523 = vpop.f32.mrb[0].mxu0
        %v524 = vadd.f32 %v375, %v523
        %v525 = vpop.f32.mrb[0].mxu0
        %526 = vmatprep.mubr.bf16.mxu0 0
        %527 = vmatmul.mubr.bf16.gmra.mrb[0].mxu0 %v446
        %v528 = vpop.f32.mrb[0].mxu0
        %v529 = vadd.f32 %v375, %v528
        %v530 = vpop.f32.mrb[0].mxu0
        %v531 = vpop.f32.mrb[0].mxu0
        %v532 = vadd.f32 %v375, %v531
        %v533 = vpop.f32.mrb[0].mxu0
        %534 = vmatprep.mubr.bf16.mxu0 0
        %535 = vmatmul.mubr.bf16.gmra.mrb[0].mxu0 %v449
        %v536 = vpop.f32.mrb[0].mxu0
        %v537 = vadd.f32 %v375, %v536
        %v538 = vpop.f32.mrb[0].mxu0
        %v539 = vpop.f32.mrb[0].mxu0
        %v540 = vadd.f32 %v375, %v539
        %v541 = vpop.f32.mrb[0].mxu0
        %542 = vmatprep.mubr.bf16.mxu0 0
        %543 = vmatmul.mubr.bf16.gmra.mrb[0].mxu0 %v452
        %v544 = vpop.f32.mrb[0].mxu0
        %v545 = vadd.f32 %v375, %v544
        %v546 = vpop.f32.mrb[0].mxu0
        %v547 = vpop.f32.mrb[0].mxu0
        %v548 = vadd.f32 %v375, %v547
        %v549 = vpop.f32.mrb[0].mxu0
        %550 = vdwg.mxu0
        %v551 = vmax.f32 %v489, 0.0
        %v552 = vmax.f32 %v492, 0.0
        %v553 = vmax.f32 %v497, 0.0
        %v554 = vmax.f32 %v500, 0.0
        %v555 = vmax.f32 %v505, 0.0
        %v556 = vmax.f32 %v508, 0.0
        %v557 = vmax.f32 %v513, 0.0
        %v558 = vmax.f32 %v516, 0.0
        %v559 = vmax.f32 %v521, 0.0
        %v560 = vmax.f32 %v524, 0.0
        %v561 = vmax.f32 %v529, 0.0
        %v562 = vmax.f32 %v532, 0.0
        %v563 = vmax.f32 %v537, 0.0
        %v564 = vmax.f32 %v540, 0.0
        %v565 = vmax.f32 %v545, 0.0
        %v566 = vmax.f32 %v548, 0.0
        %v567 = vpack.c.bf16 %v552, %v551
        %v568 = vpack.c.bf16 %v554, %v553
        %v569 = vpack.c.bf16 %v556, %v555
        %v570 = vpack.c.bf16 %v558, %v557
        %v571 = vpack.c.bf16 %v560, %v559
        %v572 = vpack.c.bf16 %v562, %v561
        %v573 = vpack.c.bf16 %v564, %v563
        %v574 = vpack.c.bf16 %v566, %v565
        %v576 = vlaneseq
        %v577 = vshrl.u32 %v576, 7
        %v578 = vsub.s32 0, %v577
        %v579 = vrot.slane %v354, %v578
        %v597 = vunpack.c.l.b16 %v338
        %v598 = vunpack.c.l.b16 %v339
        %v599 = vunpack.c.l.b16 %v340
        %v600 = vunpack.c.l.b16 %v341
        %v601 = vunpack.c.l.b16 %v342
        %v602 = vunpack.c.l.b16 %v343
        %v603 = vunpack.c.l.b16 %v344
        %v604 = vunpack.c.l.b16 %v345
        %v605 = vunpack.c.l.b16 %v346
        %v606 = vunpack.c.l.b16 %v347
        %v607 = vunpack.c.l.b16 %v348
        %v608 = vunpack.c.l.b16 %v349
        %v609 = vunpack.c.l.b16 %v350
        %v610 = vunpack.c.l.b16 %v351
        %v611 = vunpack.c.l.b16 %v352
        %v612 = vunpack.c.l.b16 %v353
        %v613 = vpack.c.b16 %v598, %v597
        %v614 = vpack.c.b16 %v600, %v599
        %v615 = vpack.c.b16 %v602, %v601
        %v616 = vpack.c.b16 %v604, %v603
        %v617 = vpack.c.b16 %v606, %v605
        %v618 = vpack.c.b16 %v608, %v607
        %v619 = vpack.c.b16 %v610, %v609
        %v620 = vpack.c.b16 %v612, %v611
        %629 = vmatprep.subr.bf16.mxu0 0
        %630 = vmatpush1.bf16.msra.mxu0 %v613
        %631 = vmatprep.subr.bf16.mxu0 0
        %632 = vmatpush1.bf16.msra.mxu0 %v614
        %633 = vmatprep.subr.bf16.mxu0 0
        %634 = vmatpush1.bf16.msra.mxu0 %v615
        %635 = vmatprep.subr.bf16.mxu0 0
        %636 = vmatpush1.bf16.msra.mxu0 %v616
        %637 = vmatprep.subr.bf16.mxu0 0
        %638 = vmatpush1.bf16.msra.mxu0 %v617
        %639 = vmatprep.subr.bf16.mxu0 0
        %640 = vmatpush1.bf16.msra.mxu0 %v618
        %641 = vmatprep.subr.bf16.mxu0 0
        %642 = vmatpush1.bf16.msra.mxu0 %v619
        %643 = vmatprep.subr.bf16.mxu0 0
        %644 = vmatpush1.bf16.msra.mxu0 %v620
        %645 = vmatprep.subr.bf16.mxu0 0
        %646 = vmatpush1.bf16.msra.mxu0 0
        %647 = vmatprep.subr.bf16.mxu0 0
        %648 = vmatpush1.bf16.msra.mxu0 0
        %649 = vmatprep.subr.bf16.mxu0 0
        %650 = vmatpush1.bf16.msra.mxu0 0
        %651 = vmatprep.subr.bf16.mxu0 0
        %652 = vmatpush1.bf16.msra.mxu0 0
        %653 = vmatprep.subr.bf16.mxu0 0
        %654 = vmatpush1.bf16.msra.mxu0 0
        %655 = vmatprep.subr.bf16.mxu0 0
        %656 = vmatpush1.bf16.msra.mxu0 0
        %657 = vmatprep.subr.bf16.mxu0 0
        %658 = vmatpush1.bf16.msra.mxu0 0
        %659 = vmatprep.subr.bf16.mxu0 0
        %660 = vmatpush1.bf16.msra.mxu0 0
        %661 = vmatprep.mubr.bf16.mxu0 0
        %662 = vmatmul.mubr.bf16.gmra.mrb[0].mxu0 %v567
        %v663 = vpop.f32.mrb[0].mxu0
        %v664 = vadd.f32 %v579, %v663
        %v665 = vpop.f32.mrb[0].mxu0
        %v666 = vpop.f32.mrb[0].mxu0
        %v667 = vadd.f32 %v579, %v666
        %v668 = vpop.f32.mrb[0].mxu0
        %669 = vmatprep.mubr.bf16.mxu0 0
        %670 = vmatmul.mubr.bf16.gmra.mrb[0].mxu0 %v568
        %v671 = vpop.f32.mrb[0].mxu0
        %v672 = vadd.f32 %v579, %v671
        %v673 = vpop.f32.mrb[0].mxu0
        %v674 = vpop.f32.mrb[0].mxu0
        %v675 = vadd.f32 %v579, %v674
        %v676 = vpop.f32.mrb[0].mxu0
        %677 = vmatprep.mubr.bf16.mxu0 0
        %678 = vmatmul.mubr.bf16.gmra.mrb[0].mxu0 %v569
        %v679 = vpop.f32.mrb[0].mxu0
        %v680 = vadd.f32 %v579, %v679
        %v681 = vpop.f32.mrb[0].mxu0
        %v682 = vpop.f32.mrb[0].mxu0
        %v683 = vadd.f32 %v579, %v682
        %v684 = vpop.f32.mrb[0].mxu0
        %685 = vmatprep.mubr.bf16.mxu0 0
        %686 = vmatmul.mubr.bf16.gmra.mrb[0].mxu0 %v570
        %v687 = vpop.f32.mrb[0].mxu0
        %v688 = vadd.f32 %v579, %v687
        %v689 = vpop.f32.mrb[0].mxu0
        %v690 = vpop.f32.mrb[0].mxu0
        %v691 = vadd.f32 %v579, %v690
        %v692 = vpop.f32.mrb[0].mxu0
        %693 = vmatprep.mubr.bf16.mxu0 0
        %694 = vmatmul.mubr.bf16.gmra.mrb[0].mxu0 %v571
        %v695 = vpop.f32.mrb[0].mxu0
        %v696 = vadd.f32 %v579, %v695
        %v697 = vpop.f32.mrb[0].mxu0
        %v698 = vpop.f32.mrb[0].mxu0
        %v699 = vadd.f32 %v579, %v698
        %v700 = vpop.f32.mrb[0].mxu0
        %701 = vmatprep.mubr.bf16.mxu0 0
        %702 = vmatmul.mubr.bf16.gmra.mrb[0].mxu0 %v572
        %v703 = vpop.f32.mrb[0].mxu0
        %v704 = vadd.f32 %v579, %v703
        %v705 = vpop.f32.mrb[0].mxu0
        %v706 = vpop.f32.mrb[0].mxu0
        %v707 = vadd.f32 %v579, %v706
        %v708 = vpop.f32.mrb[0].mxu0
        %709 = vmatprep.mubr.bf16.mxu0 0
        %710 = vmatmul.mubr.bf16.gmra.mrb[0].mxu0 %v573
        %v711 = vpop.f32.mrb[0].mxu0
        %v712 = vadd.f32 %v579, %v711
        %v713 = vpop.f32.mrb[0].mxu0
        %v714 = vpop.f32.mrb[0].mxu0
        %v715 = vadd.f32 %v579, %v714
        %v716 = vpop.f32.mrb[0].mxu0
        %717 = vmatprep.mubr.bf16.mxu0 0
        %718 = vmatmul.mubr.bf16.gmra.mrb[0].mxu0 %v574
        %v719 = vpop.f32.mrb[0].mxu0
        %v720 = vadd.f32 %v579, %v719
        %v721 = vpop.f32.mrb[0].mxu0
        %v722 = vpop.f32.mrb[0].mxu0
        %v723 = vadd.f32 %v579, %v722
        %v724 = vpop.f32.mrb[0].mxu0
        %725 = vdwg.mxu0
        %v726 = vpack.c.bf16 %v667, %v664
        %v727 = vpack.c.bf16 %v675, %v672
        %v728 = vpack.c.bf16 %v683, %v680
        %v729 = vpack.c.bf16 %v691, %v688
        %v730 = vpack.c.bf16 %v699, %v696
        %v731 = vpack.c.bf16 %v707, %v704
        %v732 = vpack.c.bf16 %v715, %v712
        %v733 = vpack.c.bf16 %v723, %v720
        %v750 = vunpack.c.l.b16 %v355
        %v751 = vunpack.c.l.b16 %v356
        %v752 = vunpack.c.l.b16 %v357
        %v753 = vunpack.c.l.b16 %v358
        %v754 = vunpack.c.l.b16 %v359
        %v755 = vunpack.c.l.b16 %v360
        %v756 = vunpack.c.l.b16 %v361
        %v757 = vunpack.c.l.b16 %v362
        %v758 = vunpack.c.l.b16 %v363
        %v759 = vunpack.c.l.b16 %v364
        %v760 = vunpack.c.l.b16 %v365
        %v761 = vunpack.c.l.b16 %v366
        %v762 = vunpack.c.l.b16 %v367
        %v763 = vunpack.c.l.b16 %v368
        %v764 = vunpack.c.l.b16 %v369
        %v765 = vunpack.c.l.b16 %v370
        %v766 = vpack.c.b16 %v751, %v750
        %v767 = vpack.c.b16 %v753, %v752
        %v768 = vpack.c.b16 %v755, %v754
        %v769 = vpack.c.b16 %v757, %v756
        %v770 = vpack.c.b16 %v759, %v758
        %v771 = vpack.c.b16 %v761, %v760
        %v772 = vpack.c.b16 %v763, %v762
        %v773 = vpack.c.b16 %v765, %v764
        %782 = vmatprep.subr.bf16.mxu0 0
        %783 = vmatpush1.bf16.msra.mxu0 %v766
        %784 = vmatprep.subr.bf16.mxu0 0
        %785 = vmatpush1.bf16.msra.mxu0 %v767
        %786 = vmatprep.subr.bf16.mxu0 0
        %787 = vmatpush1.bf16.msra.mxu0 %v768
        %788 = vmatprep.subr.bf16.mxu0 0
        %789 = vmatpush1.bf16.msra.mxu0 %v769
        %790 = vmatprep.subr.bf16.mxu0 0
        %791 = vmatpush1.bf16.msra.mxu0 %v770
        %792 = vmatprep.subr.bf16.mxu0 0
        %793 = vmatpush1.bf16.msra.mxu0 %v771
        %794 = vmatprep.subr.bf16.mxu0 0
        %795 = vmatpush1.bf16.msra.mxu0 %v772
        %796 = vmatprep.subr.bf16.mxu0 0
        %797 = vmatpush1.bf16.msra.mxu0 %v773
        %798 = vmatprep.subr.bf16.mxu0 0
        %799 = vmatpush1.bf16.msra.mxu0 0
        %800 = vmatprep.subr.bf16.mxu0 0
        %801 = vmatpush1.bf16.msra.mxu0 0
        %802 = vmatprep.subr.bf16.mxu0 0
        %803 = vmatpush1.bf16.msra.mxu0 0
        %804 = vmatprep.subr.bf16.mxu0 0
        %805 = vmatpush1.bf16.msra.mxu0 0
        %806 = vmatprep.subr.bf16.mxu0 0
        %807 = vmatpush1.bf16.msra.mxu0 0
        %808 = vmatprep.subr.bf16.mxu0 0
        %809 = vmatpush1.bf16.msra.mxu0 0
        %810 = vmatprep.subr.bf16.mxu0 0
        %811 = vmatpush1.bf16.msra.mxu0 0
        %812 = vmatprep.subr.bf16.mxu0 0
        %813 = vmatpush1.bf16.msra.mxu0 0
        %814 = vmatprep.mubr.bf16.mxu0 0
        %815 = vmatmul.mubr.bf16.gmra.mrb[0].mxu0 %v726
        %v816 = vpop.f32.mrb[0].mxu0
        %v817 = vadd.f32 0.0, %v816
        %v818 = vpop.f32.mrb[0].mxu0
        %v819 = vpop.f32.mrb[0].mxu0
        %v820 = vadd.f32 0.0, %v819
        %v821 = vpop.f32.mrb[0].mxu0
        %822 = vmatprep.mubr.bf16.mxu0 0
        %823 = vmatmul.mubr.bf16.gmra.mrb[0].mxu0 %v727
        %v824 = vpop.f32.mrb[0].mxu0
        %v825 = vadd.f32 0.0, %v824
        %v826 = vpop.f32.mrb[0].mxu0
        %v827 = vpop.f32.mrb[0].mxu0
        %v828 = vadd.f32 0.0, %v827
        %v829 = vpop.f32.mrb[0].mxu0
        %830 = vmatprep.mubr.bf16.mxu0 0
        %831 = vmatmul.mubr.bf16.gmra.mrb[0].mxu0 %v728
        %v832 = vpop.f32.mrb[0].mxu0
        %v833 = vadd.f32 0.0, %v832
        %v834 = vpop.f32.mrb[0].mxu0
        %v835 = vpop.f32.mrb[0].mxu0
        %v836 = vadd.f32 0.0, %v835
        %v837 = vpop.f32.mrb[0].mxu0
        %838 = vmatprep.mubr.bf16.mxu0 0
        %839 = vmatmul.mubr.bf16.gmra.mrb[0].mxu0 %v729
        %v840 = vpop.f32.mrb[0].mxu0
        %v841 = vadd.f32 0.0, %v840
        %v842 = vpop.f32.mrb[0].mxu0
        %v843 = vpop.f32.mrb[0].mxu0
        %v844 = vadd.f32 0.0, %v843
        %v845 = vpop.f32.mrb[0].mxu0
        %846 = vmatprep.mubr.bf16.mxu0 0
        %847 = vmatmul.mubr.bf16.gmra.mrb[0].mxu0 %v730
        %v848 = vpop.f32.mrb[0].mxu0
        %v849 = vadd.f32 0.0, %v848
        %v850 = vpop.f32.mrb[0].mxu0
        %v851 = vpop.f32.mrb[0].mxu0
        %v852 = vadd.f32 0.0, %v851
        %v853 = vpop.f32.mrb[0].mxu0
        %854 = vmatprep.mubr.bf16.mxu0 0
        %855 = vmatmul.mubr.bf16.gmra.mrb[0].mxu0 %v731
        %v856 = vpop.f32.mrb[0].mxu0
        %v857 = vadd.f32 0.0, %v856
        %v858 = vpop.f32.mrb[0].mxu0
        %v859 = vpop.f32.mrb[0].mxu0
        %v860 = vadd.f32 0.0, %v859
        %v861 = vpop.f32.mrb[0].mxu0
        %862 = vmatprep.mubr.bf16.mxu0 0
        %863 = vmatmul.mubr.bf16.gmra.mrb[0].mxu0 %v732
        %v864 = vpop.f32.mrb[0].mxu0
        %v865 = vadd.f32 0.0, %v864
        %v866 = vpop.f32.mrb[0].mxu0
        %v867 = vpop.f32.mrb[0].mxu0
        %v868 = vadd.f32 0.0, %v867
        %v869 = vpop.f32.mrb[0].mxu0
        %870 = vmatprep.mubr.bf16.mxu0 0
        %871 = vmatmul.mubr.bf16.gmra.mrb[0].mxu0 %v733
        %v872 = vpop.f32.mrb[0].mxu0
        %v873 = vadd.f32 0.0, %v872
        %v874 = vpop.f32.mrb[0].mxu0
        %v875 = vpop.f32.mrb[0].mxu0
        %v876 = vadd.f32 0.0, %v875
        %v877 = vpop.f32.mrb[0].mxu0
        %878 = vdwg.mxu0
        %v879 = vpack.c.bf16 %v820, %v817
        %v880 = vpack.c.bf16 %v828, %v825
        %v881 = vpack.c.bf16 %v836, %v833
        %v882 = vpack.c.bf16 %v844, %v841
        %v883 = vpack.c.bf16 %v852, %v849
        %v884 = vpack.c.bf16 %v860, %v857
        %v885 = vpack.c.bf16 %v868, %v865
        %v886 = vpack.c.bf16 %v876, %v873
        %v895 = vunpack.c.l.b16 %v879
        %v896 = vunpack.c.h.b16 %v879
        %v897 = vunpack.c.l.b16 %v880
        %v898 = vunpack.c.h.b16 %v880
        %v899 = vunpack.c.l.b16 %v881
        %v900 = vunpack.c.h.b16 %v881
        %v901 = vunpack.c.l.b16 %v882
        %v902 = vunpack.c.h.b16 %v882
        %v903 = vunpack.c.l.b16 %v883
        %v904 = vunpack.c.h.b16 %v883
        %v905 = vunpack.c.l.b16 %v884
        %v906 = vunpack.c.h.b16 %v884
        %v907 = vunpack.c.l.b16 %v885
        %v908 = vunpack.c.h.b16 %v885
        %v909 = vunpack.c.l.b16 %v886
        %v910 = vunpack.c.h.b16 %v886
        %v911 = vpack.c.b16 %v895, %v895
        %v912 = vpack.c.b16 %v896, %v896
        %v913 = vpack.c.b16 %v897, %v897
        %v914 = vpack.c.b16 %v898, %v898
        %v915 = vpack.c.b16 %v899, %v899
        %v916 = vpack.c.b16 %v900, %v900
        %v917 = vpack.c.b16 %v901, %v901
        %v918 = vpack.c.b16 %v902, %v902
        %v919 = vpack.c.b16 %v903, %v903
        %v920 = vpack.c.b16 %v904, %v904
        %v921 = vpack.c.b16 %v905, %v905
        %v922 = vpack.c.b16 %v906, %v906
        %v923 = vpack.c.b16 %v907, %v907
        %v924 = vpack.c.b16 %v908, %v908
        %v925 = vpack.c.b16 %v909, %v909
        %v926 = vpack.c.b16 %v910, %v910
        %943 = vst [vmem:[%s299] sm:$0xf] %v911
        %944 = vst [vmem:[%s299 + $0x4] sm:$0xf] %v912
        %945 = vst [vmem:[%s299 + $0x8] sm:$0xf] %v913
        %946 = vst [vmem:[%s299 + $0xc] sm:$0xf] %v914
        %947 = vst [vmem:[%s299 + $0x10] sm:$0xf] %v915
        %948 = vst [vmem:[%s299 + $0x14] sm:$0xf] %v916
        %949 = vst [vmem:[%s299 + $0x18] sm:$0xf] %v917
        %950 = vst [vmem:[%s299 + $0x1c] sm:$0xf] %v918
        %951 = vst [vmem:[%s299 + $0x20] sm:$0xf] %v919
        %952 = vst [vmem:[%s299 + $0x24] sm:$0xf] %v920
        %953 = vst [vmem:[%s299 + $0x28] sm:$0xf] %v921
        %954 = vst [vmem:[%s299 + $0x2c] sm:$0xf] %v922
        %955 = vst [vmem:[%s299 + $0x30] sm:$0xf] %v923
        %956 = vst [vmem:[%s299 + $0x34] sm:$0xf] %v924
        %957 = vst [vmem:[%s299 + $0x38] sm:$0xf] %v925
        %958 = vst [vmem:[%s299 + $0x3c] sm:$0xf] %v926
        %s959 = sand.u32 %s181, 1
        %s960 = scalar_lea.sflag [#allocation4], %s959
        %s961 = sand.u32 %s181, 1
        %s962 = smul.addr %s961, 64
        %s963 = scalar_lea.vmem [#allocation5], %s962
        // Predicated region
        $region49: #{tpu_custom_call.1} parent=43 // pred_check
          %p964 = pneg %p191
        $region50: #{tpu_custom_call.1} parent=43 // pred_check_branch
          %966 = sbr.rel (%p964) target = $region52
        $region51: #{tpu_custom_call.1} parent=43 // pred_region
          %s967 = smul.u32 16, %s26
          %s969 = ssub.s32 1024, 1024
          %970 = vsyncadd %s960, %s969
          %s971 = smul.addr %s25, 16
          %s972 = sadd.s32 %s967, %s971
          %s973 = smul.addr %s972, 64
          %s974 = scalar_lea.hbm %s6, %s973
          %s975 = sshll.u32 %s963, 4
          %s976 = int_to_ptr.vmem [resolvable:$true] %s975
          %981 = dma.vmem_to_hbm [thread:$0]  %s976, 1024, %s974, %s960, 64, 64, 4
        $region52: #{tpu_custom_call.1} parent=43 // pred_fallthru
          _
      $region44: #{tpu_custom_call.1} parent=5 // pred_fallthru
        _
      %p982 = scmp.le.s32.totalorder 2, %s16
      // Predicated region
      $region53: #{tpu_custom_call.1} parent=5 // pred_check
        %p983 = pneg %p982
      $region54: #{tpu_custom_call.1} parent=5 // pred_check_branch
        %985 = sbr.rel (%p983) target = $region56
      $region55: #{tpu_custom_call.1} parent=5 // pred_region
        %s986 = ssub.s32 %s16, 2
        // Predicated region
        $region57: #{tpu_custom_call.1} parent=55 // pred_check
          %p987 = pneg %p197
        $region58: #{tpu_custom_call.1} parent=55 // pred_check_branch
          %989 = sbr.rel (%p987) target = $region60
        $region59: #{tpu_custom_call.1} parent=55 // pred_region
          %s990 = sand.u32 %s182, 1
          %s991 = scalar_lea.sflag [#allocation4], %s990
          %s992 = sand.u32 %s182, 1
          %s993 = smul.addr %s992, 64
          %s994 = scalar_lea.vmem [#allocation5], %s993
          %995 = dma.done %s991, 1024
        $region60: #{tpu_custom_call.1} parent=55 // pred_fallthru
          _
      $region56: #{tpu_custom_call.1} parent=5 // pred_fallthru
        _
    $region6: #{tpu_custom_call.1} parent=1 // loop_footer
      %s20 = sadd.s32 1, %s16
    $region7: #{tpu_custom_call.1} parent=1 // loop_footer_branch
      %15 = sbr.rel target = $region3
    $region8: #{tpu_custom_call.1} parent=1 // loop_exit
      _
    %996 = vsyncpa [#allocation3], 1
    %s997 = scalar_lea.sflag [#allocation3], 1
    %998 = vsyncpa %s997, 1
    %999 = vsyncpa [#allocation4], 1
    %s1000 = scalar_lea.sflag [#allocation4], 1
    %1001 = vsyncpa %s1000, 1

</llo_original>
